<compile_context>
chip_gen: v6e
topology: v6e:2x2x1
jax: 0.10.0
libtpu: 0.0.40
codegen_flags: <defaults>
</compile_context>

<pallas_src>
import jax
import jax.numpy as jnp
from jax import lax
from jax.experimental import pallas as pl
from jax.experimental.pallas import tpu as pltpu


# ---------------------------------------------------------------------------
# Kernel
# ---------------------------------------------------------------------------
def noupd_kernel(eli_ref,              # SMEM scalar prefetch: (2, E) int32
                 x_ref,                # (N, DP)       bf16  node features (K-padded)
                 a_ref,                # (N, N)        f32   normalized adjacency
                 w_ref,                # (DP+448, 256) bf16  packed weight slab
                 b_ref,                # (8, 256)      f32   packed bias / fold slab
                 out_ref,              # (N, 128)      f32   [emb1 | emb2 | pred]
                 h2_scr):              # (N, 32)       f32   staging for row gather
    f32 = jnp.float32
    bf16 = jnp.bfloat16

    n_nodes, dp = x_ref.shape
    n_edges = eli_ref.shape[1]

    # ---- static views into the packed slabs ----
    w1 = w_ref[0:dp, 0:256]               # preprocess1
    w2 = w_ref[dp:dp + 256, 0:128]        # preprocess2
    wg1 = w_ref[dp + 256:dp + 384, 0:64]  # conv1 weight
    wg2 = w_ref[dp + 384:dp + 448, 0:32]  # conv2 weight

    b1 = b_ref[0:1, 0:256]
    b2 = b_ref[1:2, 0:128]
    bg1 = b_ref[2:3, 0:64]
    bg2 = b_ref[3:4, 0:32]
    wp_row = b_ref[4:5, 0:32]             # postprocess1 W folded over out dim (f32)
    bp_sum = b_ref[5:6, 0:1]              # postprocess1 b folded (scalar)

    a = a_ref[...]                        # f32 adjacency

    # preprocess1 / preprocess2 (+ relu; dropout p=0.0 is a no-op)
    h = jnp.dot(x_ref[...], w1, preferred_element_type=f32) + b1
    h = jnp.maximum(h, 0.0)
    h = jnp.dot(h.astype(bf16), w2, preferred_element_type=f32) + b2
    h = jnp.maximum(h, 0.0)

    # conv1 (GCN), reassociated: A_norm @ (h @ Wg1); A/t kept in f32.
    t1 = jnp.dot(h.astype(bf16), wg1, preferred_element_type=f32)
    h1 = jnp.dot(a, t1, preferred_element_type=f32) + bg1
    h1 = jnp.maximum(h1, 0.0)             # current_embeddings[0]

    # conv2 (GCN)
    t2 = jnp.dot(h1.astype(bf16), wg2, preferred_element_type=f32)
    h2 = jnp.dot(a, t2, preferred_element_type=f32) + bg2
    h2 = jnp.maximum(h2, 0.0)             # current_embeddings[1]

    # edge_label_index gather: stage h2 once, then 2E dynamic-row reads that
    # stay in vregs (no per-row scratch stores / reloads).
    h2_scr[...] = h2
    hs_rows, hd_rows = [], []
    for e in range(n_edges):              # E is small & static -> unrolled
        hs_rows.append(h2_scr[pl.ds(eli_ref[0, e], 1), :])
        hd_rows.append(h2_scr[pl.ds(eli_ref[1, e], 1), :])
    hs = jnp.concatenate(hs_rows, axis=0)  # (E, 32)
    hd = jnp.concatenate(hd_rows, axis=0)  # (E, 32)

    # postprocess1 + sum(-1) folded:  (hs*hd) @ Wp.sum(1) + bp.sum()
    # done as VPU multiply + XLU lane reduce (no 1-column MXU matmul).
    had = hs * hd
    pred = jnp.sum(had * wp_row, axis=-1, keepdims=True) + bp_sum   # (E, 1) f32

    # Pack the three results lane-dense into one (N, 128) slab -> a single
    # unmasked full-width store / one writeback DMA.
    pred_block = jnp.broadcast_to(pred, (n_edges, 32)).astype(f32)
    pad = n_nodes - n_edges
    if pad > 0:
        pred_block = jnp.concatenate(
            [pred_block, jnp.zeros((pad, 32), f32)], axis=0)
    out_ref[...] = jnp.concatenate([h1, h2, pred_block], axis=-1)


# ---------------------------------------------------------------------------
# One-time preprocessing (hoisted off the per-call hot path)
# ---------------------------------------------------------------------------
def _round_up(v, m):
    return (v + m - 1) // m * m


def build_gcn_adjacency(edge_index, num_nodes):
    # Matches PyG GCNConv gcn_norm: directed edges as given, scatter-ADD so
    # parallel edges are counted, self-loops added, deg[i] = in-degree(i) + 1,
    # A_hat[i, j] = (#edges j->i + [i==j]) * d_i^-1/2 * d_j^-1/2.
    src, dst = edge_index[0], edge_index[1]
    A = jnp.zeros((num_nodes, num_nodes), jnp.float32).at[dst, src].add(1.0)
    A = A + jnp.eye(num_nodes, dtype=jnp.float32)
    deg = jnp.sum(A, axis=1)
    dinv = jnp.where(deg > 0, lax.rsqrt(deg), 0.0)
    return (A * dinv[:, None]) * dinv[None, :]


def prepare_noupd(params, edge_index, num_nodes):
    """Per-graph / per-parameter-set preprocessing; call once, reuse per step."""
    (w1, b1, w2, b2, wg1, bg1, wg2, bg2, wp, bp) = params
    bf16 = jnp.bfloat16
    din = w1.shape[0]
    dp = _round_up(din, 16)                      # bf16 sublane tile alignment

    # Packed bf16 weight slab: rows [0:dp]=W1, [dp:dp+256]=W2,
    # [dp+256:dp+384]=Wg1, [dp+384:dp+448]=Wg2 (columns 0:width, rest zero).
    w_slab = jnp.zeros((dp + 448, 256), bf16)
    w_slab = w_slab.at[0:din, 0:256].set(w1.astype(bf16))
    w_slab = w_slab.at[dp:dp + 256, 0:128].set(w2.astype(bf16))
    w_slab = w_slab.at[dp + 256:dp + 384, 0:64].set(wg1.astype(bf16))
    w_slab = w_slab.at[dp + 384:dp + 448, 0:32].set(wg2.astype(bf16))

    # Packed f32 bias / fold slab (one row per vector).
    b_slab = jnp.zeros((8, 256), jnp.float32)
    b_slab = b_slab.at[0, 0:256].set(b1.reshape(-1))
    b_slab = b_slab.at[1, 0:128].set(b2.reshape(-1))
    b_slab = b_slab.at[2, 0:64].set(bg1.reshape(-1))
    b_slab = b_slab.at[3, 0:32].set(bg2.reshape(-1))
    b_slab = b_slab.at[4, 0:32].set(jnp.sum(wp, axis=1))   # Wp.sum(1) fold
    b_slab = b_slab.at[5, 0].set(jnp.sum(bp))              # bp.sum() fold

    a_norm = build_gcn_adjacency(edge_index, num_nodes)    # kept in f32
    return a_norm, w_slab, b_slab


# ---------------------------------------------------------------------------
# Per-step forward (hot path)
# ---------------------------------------------------------------------------
def noupd_forward(x, edge_label_index, prepared):
    a_norm, w_slab, b_slab = prepared
    N, din = x.shape
    E = edge_label_index.shape[1]
    dp = w_slab.shape[0] - 448
    assert E <= N, "pred is packed into rows 0:E of the (N,128) output slab"
    # TODO(synk): if E > N, emit pred as a separate output instead of slab-packing.

    x_in = x.astype(jnp.bfloat16)
    if din < dp:
        x_in = jnp.pad(x_in, ((0, 0), (0, dp - din)))       # zero K-padding

    grid_spec = pltpu.PrefetchScalarGridSpec(
        num_scalar_prefetch=1,
        grid=(1,),
        in_specs=[
            pl.BlockSpec((N, dp), lambda i, eli: (0, 0)),
            pl.BlockSpec((N, N), lambda i, eli: (0, 0)),
            pl.BlockSpec(w_slab.shape, lambda i, eli: (0, 0)),
            pl.BlockSpec(b_slab.shape, lambda i, eli: (0, 0)),
        ],
        out_specs=pl.BlockSpec((N, 128), lambda i, eli: (0, 0)),
        scratch_shapes=[pltpu.VMEM((N, 32), jnp.float32)],   # h2 gather staging
    )

    out = pl.pallas_call(
        noupd_kernel,
        out_shape=jax.ShapeDtypeStruct((N, 128), jnp.float32),
        grid_spec=grid_spec,
        compiler_params=pltpu.CompilerParams(
            dimension_semantics=("arbitrary",),
            vmem_limit_bytes=4 * 1024 * 1024,
        ),
    )(edge_label_index.astype(jnp.int32), x_in, a_norm, w_slab, b_slab)

    pred = out[:E, 96]          # lane 96 carries the folded postprocess1 sum
    emb1 = out[:, 0:64]
    emb2 = out[:, 64:96]
    return pred, (emb1, emb2)


# ---------------------------------------------------------------------------
# Pure-JAX f32 reference mirroring the PyTorch module
# ---------------------------------------------------------------------------
def reference_forward(x, edge_index, edge_label_index, params):
    (w1, b1, w2, b2, wg1, bg1, wg2, bg2, wp, bp) = params
    a_norm = build_gcn_adjacency(edge_index, x.shape[0])
    h = jax.nn.relu(x @ w1 + b1)
    h = jax.nn.relu(h @ w2 + b2)
    h1 = jax.nn.relu(a_norm @ (h @ wg1) + bg1)
    h2 = jax.nn.relu(a_norm @ (h1 @ wg2) + bg2)
    hs = h2[edge_label_index[0]]
    hd = h2[edge_label_index[1]]
    out = (hs * hd) @ wp + bp
    return jnp.sum(out, axis=-1), (h1, h2)


def init_params(key, input_dim):
    dims = [(input_dim, 256), (256, 128), (128, 64), (64, 32), (32, 2)]
    params = []
    for i, (din, dout) in enumerate(dims):
        kw, kb = jax.random.split(jax.random.fold_in(key, i))
        scale = 1.0 / jnp.sqrt(jnp.float32(din))
        W = jax.random.uniform(kw, (din, dout), jnp.float32, -scale, scale)
        b = jax.random.uniform(kb, (1, dout), jnp.float32, -scale, scale)
        params += [W, b]
    return tuple(params)


if __name__ == "__main__":
    key = jax.random.PRNGKey(0)
    N = 16          # num_nodes
    input_dim = 8
    M = 32          # message-passing edges
    E = 8           # edges to score (edge_label_index)

    kx, ke, kl, kp = jax.random.split(key, 4)
    x = jax.random.normal(kx, (N, input_dim), jnp.float32)
    edge_index = jax.random.randint(ke, (2, M), 0, N, jnp.int32)
    edge_label_index = jax.random.randint(kl, (2, E), 0, N, jnp.int32)
    params = init_params(kp, input_dim)

    # One-time graph / parameter preprocessing (off the per-step path).
    prepared = prepare_noupd(params, edge_index, N)
    prepared = jax.block_until_ready(prepared)

    pred, (emb1, emb2) = noupd_forward(x, edge_label_index, prepared)
    jax.block_until_ready((pred, emb1, emb2))

    assert pred.shape == (E,)
    assert emb1.shape == (N, 64) and emb2.shape == (N, 32)

    # Correctness check against the f32 reference (bf16 weights -> loose tol).
    pred_r, (emb1_r, emb2_r) = reference_forward(x, edge_index,
                                                 edge_label_index, params)
    assert jnp.allclose(pred, pred_r, rtol=5e-2, atol=5e-2), "pred mismatch"
    assert jnp.allclose(emb1, emb1_r, rtol=5e-2, atol=5e-2), "emb1 mismatch"
    assert jnp.allclose(emb2, emb2_r, rtol=5e-2, atol=5e-2), "emb2 mismatch"

    print("KERNEL_OK")
</pallas_src>

<mosaic_0001>
module attributes {stable_mosaic.version = 11 : i64} {
  func.func @noupd_kernel(%arg0: i32, %arg1: memref<2x8xi32, #tpu.memory_space<smem>>, %arg2: memref<16x16xbf16, #tpu.memory_space<vmem>>, %arg3: memref<16x16xf32, #tpu.memory_space<vmem>>, %arg4: memref<464x256xbf16, #tpu.memory_space<vmem>>, %arg5: memref<8x256xf32, #tpu.memory_space<vmem>>, %arg6: memref<16x128xf32, #tpu.memory_space<vmem>>, %arg7: memref<16x32xf32, #tpu.memory_space<vmem>>) attributes {dimension_semantics = [#tpu.dimension_semantics<arbitrary>], iteration_bounds = array<i64: 1>, scalar_prefetch = 1 : i64, scratch_operands = 1 : i64, tpu.core_type = #tpu.core_type<tc>, window_params = [{pipeline_mode = #tpu.pipeline_mode<synchronous>, transform_indices = @transform_0, window_bounds = array<i64: 16, 16>}, {pipeline_mode = #tpu.pipeline_mode<synchronous>, transform_indices = @transform_1, window_bounds = array<i64: 16, 16>}, {pipeline_mode = #tpu.pipeline_mode<synchronous>, transform_indices = @transform_2, window_bounds = array<i64: 464, 256>}, {pipeline_mode = #tpu.pipeline_mode<synchronous>, transform_indices = @transform_3, window_bounds = array<i64: 8, 256>}, {pipeline_mode = #tpu.pipeline_mode<synchronous>, transform_indices = @transform_4, window_bounds = array<i64: 16, 128>}]} {
    %c0 = arith.constant 0 : index
    %c0_0 = arith.constant 0 : index
    %0 = vector.load %arg4[%c0, %c0_0] : memref<464x256xbf16, #tpu.memory_space<vmem>>, vector<16x256xbf16>
    %c16 = arith.constant 16 : index
    %c0_1 = arith.constant 0 : index
    %1 = vector.load %arg4[%c16, %c0_1] : memref<464x256xbf16, #tpu.memory_space<vmem>>, vector<256x128xbf16>
    %c272 = arith.constant 272 : index
    %c0_2 = arith.constant 0 : index
    %2 = vector.load %arg4[%c272, %c0_2] : memref<464x256xbf16, #tpu.memory_space<vmem>>, vector<128x64xbf16>
    %c400 = arith.constant 400 : index
    %c0_3 = arith.constant 0 : index
    %3 = vector.load %arg4[%c400, %c0_3] : memref<464x256xbf16, #tpu.memory_space<vmem>>, vector<64x32xbf16>
    %c0_4 = arith.constant 0 : index
    %c0_5 = arith.constant 0 : index
    %4 = vector.load %arg5[%c0_4, %c0_5] : memref<8x256xf32, #tpu.memory_space<vmem>>, vector<1x256xf32>
    %c1 = arith.constant 1 : index
    %c0_6 = arith.constant 0 : index
    %5 = vector.load %arg5[%c1, %c0_6] : memref<8x256xf32, #tpu.memory_space<vmem>>, vector<1x128xf32>
    %c2 = arith.constant 2 : index
    %c0_7 = arith.constant 0 : index
    %6 = vector.load %arg5[%c2, %c0_7] : memref<8x256xf32, #tpu.memory_space<vmem>>, vector<1x64xf32>
    %c3 = arith.constant 3 : index
    %c0_8 = arith.constant 0 : index
    %7 = vector.load %arg5[%c3, %c0_8] : memref<8x256xf32, #tpu.memory_space<vmem>>, vector<1x32xf32>
    %c4 = arith.constant 4 : index
    %c0_9 = arith.constant 0 : index
    %8 = vector.load %arg5[%c4, %c0_9] : memref<8x256xf32, #tpu.memory_space<vmem>>, vector<1x32xf32>
    %c5 = arith.constant 5 : index
    %c0_10 = arith.constant 0 : index
    %9 = vector.load %arg5[%c5, %c0_10] : memref<8x256xf32, #tpu.memory_space<vmem>>, vector<1x1xf32>
    %c0_11 = arith.constant 0 : index
    %c0_12 = arith.constant 0 : index
    %10 = vector.load %arg3[%c0_11, %c0_12] : memref<16x16xf32, #tpu.memory_space<vmem>>, vector<16x16xf32>
    %c0_13 = arith.constant 0 : index
    %c0_14 = arith.constant 0 : index
    %11 = vector.load %arg2[%c0_13, %c0_14] : memref<16x16xbf16, #tpu.memory_space<vmem>>, vector<16x16xbf16>
    %cst = arith.constant dense<0.000000e+00> : vector<16x256xf32>
    %12 = tpu.matmul %11, %0, %cst {dimension_numbers = #tpu.dot_dimension_numbers<[1], [0], [0], [1], [0, 0, 1, 1], [], []>} : vector<16x16xbf16>, vector<16x256xbf16>, vector<16x256xf32> -> vector<16x256xf32>
    %13 = vector.broadcast %4 : vector<1x256xf32> to vector<16x256xf32>
    %14 = arith.addf %12, %13 : vector<16x256xf32>
    %cst_15 = arith.constant 0.000000e+00 : f32
    %15 = vector.broadcast %cst_15 : f32 to vector<16x256xf32>
    %16 = arith.maximumf %14, %15 : vector<16x256xf32>
    %17 = arith.truncf %16 : vector<16x256xf32> to vector<16x256xbf16>
    %cst_16 = arith.constant dense<0.000000e+00> : vector<16x128xf32>
    %18 = tpu.matmul %17, %1, %cst_16 {dimension_numbers = #tpu.dot_dimension_numbers<[1], [0], [0], [1], [0, 0, 1, 1], [], []>} : vector<16x256xbf16>, vector<256x128xbf16>, vector<16x128xf32> -> vector<16x128xf32>
    %19 = vector.broadcast %5 : vector<1x128xf32> to vector<16x128xf32>
    %20 = arith.addf %18, %19 : vector<16x128xf32>
    %cst_17 = arith.constant 0.000000e+00 : f32
    %21 = vector.broadcast %cst_17 : f32 to vector<16x128xf32>
    %22 = arith.maximumf %20, %21 : vector<16x128xf32>
    %23 = arith.truncf %22 : vector<16x128xf32> to vector<16x128xbf16>
    %cst_18 = arith.constant dense<0.000000e+00> : vector<16x64xf32>
    %24 = tpu.matmul %23, %2, %cst_18 {dimension_numbers = #tpu.dot_dimension_numbers<[1], [0], [0], [1], [0, 0, 1, 1], [], []>} : vector<16x128xbf16>, vector<128x64xbf16>, vector<16x64xf32> -> vector<16x64xf32>
    %cst_19 = arith.constant dense<0.000000e+00> : vector<16x64xf32>
    %25 = tpu.matmul %10, %24, %cst_19 {dimension_numbers = #tpu.dot_dimension_numbers<[1], [0], [0], [1], [0, 0, 1, 1], [], []>} : vector<16x16xf32>, vector<16x64xf32>, vector<16x64xf32> -> vector<16x64xf32>
    %26 = vector.broadcast %6 : vector<1x64xf32> to vector<16x64xf32>
    %27 = arith.addf %25, %26 : vector<16x64xf32>
    %cst_20 = arith.constant 0.000000e+00 : f32
    %28 = vector.broadcast %cst_20 : f32 to vector<16x64xf32>
    %29 = arith.maximumf %27, %28 : vector<16x64xf32>
    %30 = arith.truncf %29 : vector<16x64xf32> to vector<16x64xbf16>
    %cst_21 = arith.constant dense<0.000000e+00> : vector<16x32xf32>
    %31 = tpu.matmul %30, %3, %cst_21 {dimension_numbers = #tpu.dot_dimension_numbers<[1], [0], [0], [1], [0, 0, 1, 1], [], []>} : vector<16x64xbf16>, vector<64x32xbf16>, vector<16x32xf32> -> vector<16x32xf32>
    %cst_22 = arith.constant dense<0.000000e+00> : vector<16x32xf32>
    %32 = tpu.matmul %10, %31, %cst_22 {dimension_numbers = #tpu.dot_dimension_numbers<[1], [0], [0], [1], [0, 0, 1, 1], [], []>} : vector<16x16xf32>, vector<16x32xf32>, vector<16x32xf32> -> vector<16x32xf32>
    %33 = vector.broadcast %7 : vector<1x32xf32> to vector<16x32xf32>
    %34 = arith.addf %32, %33 : vector<16x32xf32>
    %cst_23 = arith.constant 0.000000e+00 : f32
    %35 = vector.broadcast %cst_23 : f32 to vector<16x32xf32>
    %36 = arith.maximumf %34, %35 : vector<16x32xf32>
    %c0_24 = arith.constant 0 : index
    %c0_25 = arith.constant 0 : index
    %37 = vector.load %arg7[%c0_24, %c0_25] : memref<16x32xf32, #tpu.memory_space<vmem>>, vector<16x32xf32>
    tpu.vector_store %arg7[%c0_24, %c0_25], %36 {strides = array<i32>} : memref<16x32xf32, #tpu.memory_space<vmem>>, vector<16x32xf32>,
    %c0_26 = arith.constant 0 : index
    %c0_27 = arith.constant 0 : index
    %38 = memref.load %arg1[%c0_26, %c0_27] : memref<2x8xi32, #tpu.memory_space<smem>>
    %39 = arith.index_cast %38 : i32 to index
    %c0_28 = arith.constant 0 : index
    %40 = vector.load %arg7[%39, %c0_28] : memref<16x32xf32, #tpu.memory_space<vmem>>, vector<1x32xf32>
    %c1_29 = arith.constant 1 : index
    %c0_30 = arith.constant 0 : index
    %41 = memref.load %arg1[%c1_29, %c0_30] : memref<2x8xi32, #tpu.memory_space<smem>>
    %42 = arith.index_cast %41 : i32 to index
    %c0_31 = arith.constant 0 : index
    %43 = vector.load %arg7[%42, %c0_31] : memref<16x32xf32, #tpu.memory_space<vmem>>, vector<1x32xf32>
    %c0_32 = arith.constant 0 : index
    %c1_33 = arith.constant 1 : index
    %44 = memref.load %arg1[%c0_32, %c1_33] : memref<2x8xi32, #tpu.memory_space<smem>>
    %45 = arith.index_cast %44 : i32 to index
    %c0_34 = arith.constant 0 : index
    %46 = vector.load %arg7[%45, %c0_34] : memref<16x32xf32, #tpu.memory_space<vmem>>, vector<1x32xf32>
    %c1_35 = arith.constant 1 : index
    %c1_36 = arith.constant 1 : index
    %47 = memref.load %arg1[%c1_35, %c1_36] : memref<2x8xi32, #tpu.memory_space<smem>>
    %48 = arith.index_cast %47 : i32 to index
    %c0_37 = arith.constant 0 : index
    %49 = vector.load %arg7[%48, %c0_37] : memref<16x32xf32, #tpu.memory_space<vmem>>, vector<1x32xf32>
    %c0_38 = arith.constant 0 : index
    %c2_39 = arith.constant 2 : index
    %50 = memref.load %arg1[%c0_38, %c2_39] : memref<2x8xi32, #tpu.memory_space<smem>>
    %51 = arith.index_cast %50 : i32 to index
    %c0_40 = arith.constant 0 : index
    %52 = vector.load %arg7[%51, %c0_40] : memref<16x32xf32, #tpu.memory_space<vmem>>, vector<1x32xf32>
    %c1_41 = arith.constant 1 : index
    %c2_42 = arith.constant 2 : index
    %53 = memref.load %arg1[%c1_41, %c2_42] : memref<2x8xi32, #tpu.memory_space<smem>>
    %54 = arith.index_cast %53 : i32 to index
    %c0_43 = arith.constant 0 : index
    %55 = vector.load %arg7[%54, %c0_43] : memref<16x32xf32, #tpu.memory_space<vmem>>, vector<1x32xf32>
    %c0_44 = arith.constant 0 : index
    %c3_45 = arith.constant 3 : index
    %56 = memref.load %arg1[%c0_44, %c3_45] : memref<2x8xi32, #tpu.memory_space<smem>>
    %57 = arith.index_cast %56 : i32 to index
    %c0_46 = arith.constant 0 : index
    %58 = vector.load %arg7[%57, %c0_46] : memref<16x32xf32, #tpu.memory_space<vmem>>, vector<1x32xf32>
    %c1_47 = arith.constant 1 : index
    %c3_48 = arith.constant 3 : index
    %59 = memref.load %arg1[%c1_47, %c3_48] : memref<2x8xi32, #tpu.memory_space<smem>>
    %60 = arith.index_cast %59 : i32 to index
    %c0_49 = arith.constant 0 : index
    %61 = vector.load %arg7[%60, %c0_49] : memref<16x32xf32, #tpu.memory_space<vmem>>, vector<1x32xf32>
    %c0_50 = arith.constant 0 : index
    %c4_51 = arith.constant 4 : index
    %62 = memref.load %arg1[%c0_50, %c4_51] : memref<2x8xi32, #tpu.memory_space<smem>>
    %63 = arith.index_cast %62 : i32 to index
    %c0_52 = arith.constant 0 : index
    %64 = vector.load %arg7[%63, %c0_52] : memref<16x32xf32, #tpu.memory_space<vmem>>, vector<1x32xf32>
    %c1_53 = arith.constant 1 : index
    %c4_54 = arith.constant 4 : index
    %65 = memref.load %arg1[%c1_53, %c4_54] : memref<2x8xi32, #tpu.memory_space<smem>>
    %66 = arith.index_cast %65 : i32 to index
    %c0_55 = arith.constant 0 : index
    %67 = vector.load %arg7[%66, %c0_55] : memref<16x32xf32, #tpu.memory_space<vmem>>, vector<1x32xf32>
    %c0_56 = arith.constant 0 : index
    %c5_57 = arith.constant 5 : index
    %68 = memref.load %arg1[%c0_56, %c5_57] : memref<2x8xi32, #tpu.memory_space<smem>>
    %69 = arith.index_cast %68 : i32 to index
    %c0_58 = arith.constant 0 : index
    %70 = vector.load %arg7[%69, %c0_58] : memref<16x32xf32, #tpu.memory_space<vmem>>, vector<1x32xf32>
    %c1_59 = arith.constant 1 : index
    %c5_60 = arith.constant 5 : index
    %71 = memref.load %arg1[%c1_59, %c5_60] : memref<2x8xi32, #tpu.memory_space<smem>>
    %72 = arith.index_cast %71 : i32 to index
    %c0_61 = arith.constant 0 : index
    %73 = vector.load %arg7[%72, %c0_61] : memref<16x32xf32, #tpu.memory_space<vmem>>, vector<1x32xf32>
    %c0_62 = arith.constant 0 : index
    %c6 = arith.constant 6 : index
    %74 = memref.load %arg1[%c0_62, %c6] : memref<2x8xi32, #tpu.memory_space<smem>>
    %75 = arith.index_cast %74 : i32 to index
    %c0_63 = arith.constant 0 : index
    %76 = vector.load %arg7[%75, %c0_63] : memref<16x32xf32, #tpu.memory_space<vmem>>, vector<1x32xf32>
    %c1_64 = arith.constant 1 : index
    %c6_65 = arith.constant 6 : index
    %77 = memref.load %arg1[%c1_64, %c6_65] : memref<2x8xi32, #tpu.memory_space<smem>>
    %78 = arith.index_cast %77 : i32 to index
    %c0_66 = arith.constant 0 : index
    %79 = vector.load %arg7[%78, %c0_66] : memref<16x32xf32, #tpu.memory_space<vmem>>, vector<1x32xf32>
    %c0_67 = arith.constant 0 : index
    %c7 = arith.constant 7 : index
    %80 = memref.load %arg1[%c0_67, %c7] : memref<2x8xi32, #tpu.memory_space<smem>>
    %81 = arith.index_cast %80 : i32 to index
    %c0_68 = arith.constant 0 : index
    %82 = vector.load %arg7[%81, %c0_68] : memref<16x32xf32, #tpu.memory_space<vmem>>, vector<1x32xf32>
    %c1_69 = arith.constant 1 : index
    %c7_70 = arith.constant 7 : index
    %83 = memref.load %arg1[%c1_69, %c7_70] : memref<2x8xi32, #tpu.memory_space<smem>>
    %84 = arith.index_cast %83 : i32 to index
    %c0_71 = arith.constant 0 : index
    %85 = vector.load %arg7[%84, %c0_71] : memref<16x32xf32, #tpu.memory_space<vmem>>, vector<1x32xf32>
    %86 = tpu.concatenate %40, %46, %52, %58, %64, %70, %76, %82 in 0 : vector<1x32xf32>, vector<1x32xf32>, vector<1x32xf32>, vector<1x32xf32>, vector<1x32xf32>, vector<1x32xf32>, vector<1x32xf32>, vector<1x32xf32> -> vector<8x32xf32>
    %87 = tpu.concatenate %43, %49, %55, %61, %67, %73, %79, %85 in 0 : vector<1x32xf32>, vector<1x32xf32>, vector<1x32xf32>, vector<1x32xf32>, vector<1x32xf32>, vector<1x32xf32>, vector<1x32xf32>, vector<1x32xf32> -> vector<8x32xf32>
    %88 = arith.mulf %86, %87 : vector<8x32xf32>
    %89 = vector.broadcast %8 : vector<1x32xf32> to vector<8x32xf32>
    %90 = arith.mulf %88, %89 : vector<8x32xf32>
    %cst_72 = arith.constant dense<0.000000e+00> : vector<8xf32>
    %91 = vector.multi_reduction <add>, %90, %cst_72 [1] : vector<8x32xf32> to vector<8xf32>
    %92 = vector.shape_cast %91 : vector<8xf32> to vector<8x1xf32>
    %93 = vector.broadcast %9 : vector<1x1xf32> to vector<8x1xf32>
    %94 = arith.addf %92, %93 : vector<8x1xf32>
    %95 = vector.shape_cast %94 : vector<8x1xf32> to vector<8x1xf32>
    %96 = vector.broadcast %95 : vector<8x1xf32> to vector<8x32xf32>
    %cst_73 = arith.constant 0.000000e+00 : f32
    %97 = vector.broadcast %cst_73 : f32 to vector<8x32xf32>
    %98 = tpu.concatenate %96, %97 in 0 : vector<8x32xf32>, vector<8x32xf32> -> vector<16x32xf32>
    %99 = tpu.concatenate %29, %36, %98 in 1 : vector<16x64xf32>, vector<16x32xf32>, vector<16x32xf32> -> vector<16x128xf32>
    %c0_74 = arith.constant 0 : index
    %c0_75 = arith.constant 0 : index
    %100 = vector.load %arg6[%c0_74, %c0_75] : memref<16x128xf32, #tpu.memory_space<vmem>>, vector<16x128xf32>
    tpu.vector_store %arg6[%c0_74, %c0_75], %99 {strides = array<i32>} : memref<16x128xf32, #tpu.memory_space<vmem>>, vector<16x128xf32>,
    return
  }
  func.func @transform_0(%arg0: i32, %arg1: memref<2x8xi32, #tpu.memory_space<smem>>) -> (i32, i32) {
    %c0_i32 = arith.constant 0 : i32
    %c0_i32_0 = arith.constant 0 : i32
    %c0_i32_1 = arith.constant 0 : i32
    return %c0_i32, %c0_i32_0 : i32, i32
  }
  func.func @transform_1(%arg0: i32, %arg1: memref<2x8xi32, #tpu.memory_space<smem>>) -> (i32, i32) {
    %c0_i32 = arith.constant 0 : i32
    %c0_i32_0 = arith.constant 0 : i32
    %c0_i32_1 = arith.constant 0 : i32
    return %c0_i32, %c0_i32_0 : i32, i32
  }
  func.func @transform_2(%arg0: i32, %arg1: memref<2x8xi32, #tpu.memory_space<smem>>) -> (i32, i32) {
    %c0_i32 = arith.constant 0 : i32
    %c0_i32_0 = arith.constant 0 : i32
    %c0_i32_1 = arith.constant 0 : i32
    return %c0_i32, %c0_i32_0 : i32, i32
  }
  func.func @transform_3(%arg0: i32, %arg1: memref<2x8xi32, #tpu.memory_space<smem>>) -> (i32, i32) {
    %c0_i32 = arith.constant 0 : i32
    %c0_i32_0 = arith.constant 0 : i32
    %c0_i32_1 = arith.constant 0 : i32
    return %c0_i32, %c0_i32_0 : i32, i32
  }
  func.func @transform_4(%arg0: i32, %arg1: memref<2x8xi32, #tpu.memory_space<smem>>) -> (i32, i32) {
    %c0_i32 = arith.constant 0 : i32
    %c0_i32_0 = arith.constant 0 : i32
    %c0_i32_1 = arith.constant 0 : i32
    return %c0_i32, %c0_i32_0 : i32, i32
  }
}

</mosaic_0001>

<llo_original>
// kernel: tpu_custom_call.1
$region0: #{tpu_custom_call.1}
  #allocation0 [shape = 'u32[]', space=smem, size = 0x4, offset = 0x4, fixed_abs, tag = 'smem constant byte address 0x4 - core index']
  #allocation1 [shape = 'u32[144,128]{1,0:T(1,128)}', space=vmem, size = 0x12000, scoped, tag = 'internal scratch']
  #allocation2 [shape = 'f32[16,32]{1,0:T(8,128)}', space=vmem, size = 0x2000, scoped, tag = 'scratch operand']
  #allocation3 [shape = 's32[1]{0}', space=sflag, size = 0x4, scoped, tag = 'scoped memory for tpu_custom_call.1']
  #allocation4 [shape = 'u8[1024]{0}', space=smem, size = 0x400, scoped, tag = 'prefetched SMEM operand 0']
  %s0 = inlined_call_operand.hbm [shape: s32[2,8], index: 0, kind: input, shape index: {}]
  %s1 = inlined_call_operand.hbm [shape: bf16[16,16], index: 1, kind: input, shape index: {}]
  %s2 = inlined_call_operand.hbm [shape: f32[16,16], index: 2, kind: input, shape index: {}]
  %s3 = inlined_call_operand.hbm [shape: bf16[464,256], index: 3, kind: input, shape index: {}]
  %s4 = inlined_call_operand.hbm [shape: f32[8,256], index: 4, kind: input, shape index: {}]
  %s5 = inlined_call_operand.hbm [shape: f32[16,128], index: 5, kind: output, shape index: {}]
  %s6 = sld [smem:[#allocation0]]
  $region42: #{tpu_custom_call.1} parent=0
    _
  %s8 = ssub.s32 1, %s6
  %s9 = scalar_select 0, %s8, %s6
  %11 = dma.hbm_to_smem %s0, 32, [#allocation4], [#allocation3]
  %12 = dma.done [#allocation3], 32
  %13 = sfence
  $region1: #{tpu_custom_call.1} parent=0
    #allocation5 [shape = 'u8[4096]{0}', space=vmem, size = 0x1000, scoped, tag = 'input window, operand 1, single buffered']
    #allocation6 [shape = 's32[1]{0}', space=sflag, size = 0x4, scoped, tag = 'scoped memory for tpu_custom_call.1']
    #allocation7 [shape = 's32[1]{0}', space=sflag, size = 0x4, scoped, tag = 'scoped memory for tpu_custom_call.1']
    #allocation8 [shape = 'u8[8192]{0}', space=vmem, size = 0x2000, scoped, tag = 'input window, operand 2, single buffered']
    #allocation9 [shape = 's32[1]{0}', space=sflag, size = 0x4, scoped, tag = 'scoped memory for tpu_custom_call.1']
    #allocation10 [shape = 'u8[237568]{0}', space=vmem, size = 0x3a000, scoped, tag = 'input window, operand 3, single buffered']
    #allocation11 [shape = 'u8[8192]{0}', space=vmem, size = 0x2000, scoped, tag = 'input window, operand 4, single buffered']
    #allocation12 [shape = 's32[1]{0}', space=sflag, size = 0x4, scoped, tag = 'scoped memory for tpu_custom_call.1']
    #allocation13 [shape = 'u8[8192]{0}', space=vmem, size = 0x2000, scoped, tag = 'output window, operand 0, single buffered']
    %14 = vsyncpa [#allocation6], 0
    %15 = vsyncpa [#allocation9], 0
    %16 = vsyncpa [#allocation12], 0
    %17 = vsyncpa [#allocation7], 0
    // Predicated region
    $region2: #{tpu_custom_call.1} parent=1 // pred_check
      _
    $region3: #{tpu_custom_call.1} parent=1 // pred_check_branch
      %19 = sbr.rel (0) target = $region5
    $region4: #{tpu_custom_call.1} parent=1 // pred_region
      %s21 = ssub.s32 128, 128
      %22 = vsyncadd [#allocation6], %s21
      %s23 = sshll.u32 [#allocation5], 4
      %s24 = int_to_ptr.vmem [resolvable:$true] %s23
      %29 = dma.hbm_to_vmem [thread:$0]  %s1, 128, %s24, [#allocation6], 64, 64, 4
    $region5: #{tpu_custom_call.1} parent=1 // pred_fallthru
      _
    // Predicated region
    $region6: #{tpu_custom_call.1} parent=1 // pred_check
      _
    $region7: #{tpu_custom_call.1} parent=1 // pred_check_branch
      %31 = sbr.rel (0) target = $region9
    $region8: #{tpu_custom_call.1} parent=1 // pred_region
      %s33 = ssub.s32 256, 256
      %34 = vsyncadd [#allocation9], %s33
      %s35 = sshll.u32 [#allocation8], 4
      %s36 = int_to_ptr.vmem [resolvable:$true] %s35
      %41 = dma.hbm_to_vmem [thread:$0]  %s2, 256, %s36, [#allocation9], 128, 128, 8
    $region9: #{tpu_custom_call.1} parent=1 // pred_fallthru
      _
    // Predicated region
    $region10: #{tpu_custom_call.1} parent=1 // pred_check
      _
    $region11: #{tpu_custom_call.1} parent=1 // pred_check_branch
      %43 = sbr.rel (0) target = $region13
    $region12: #{tpu_custom_call.1} parent=1 // pred_region
      %s45 = ssub.s32 7424, 7424
      %46 = vsyncadd [#allocation9], %s45
      %s47 = sshll.u32 [#allocation10], 4
      %s48 = int_to_ptr.vmem [resolvable:$true] %s47
      %53 = dma.hbm_to_vmem [thread:$0]  %s3, 7424, %s48, [#allocation9], 128, 128, 8
    $region13: #{tpu_custom_call.1} parent=1 // pred_fallthru
      _
    // Predicated region
    $region14: #{tpu_custom_call.1} parent=1 // pred_check
      _
    $region15: #{tpu_custom_call.1} parent=1 // pred_check_branch
      %55 = sbr.rel (0) target = $region17
    $region16: #{tpu_custom_call.1} parent=1 // pred_region
      %s57 = ssub.s32 256, 256
      %58 = vsyncadd [#allocation12], %s57
      %s60 = sshll.u32 [#allocation11], 4
      %s61 = int_to_ptr.vmem [resolvable:$true] %s60
      %63 = dma.hbm_to_vmem [thread:$0]  %s4, 256, %s61, [#allocation12]
    $region17: #{tpu_custom_call.1} parent=1 // pred_fallthru
      _
    // Predicated region
    $region18: #{tpu_custom_call.1} parent=1 // pred_check
      _
    $region19: #{tpu_custom_call.1} parent=1 // pred_check_branch
      %65 = sbr.rel (0) target = $region21
    $region20: #{tpu_custom_call.1} parent=1 // pred_region
      %66 = dma.done [#allocation6], 128
    $region21: #{tpu_custom_call.1} parent=1 // pred_fallthru
      _
    // Predicated region
    $region22: #{tpu_custom_call.1} parent=1 // pred_check
      _
    $region23: #{tpu_custom_call.1} parent=1 // pred_check_branch
      %68 = sbr.rel (0) target = $region25
    $region24: #{tpu_custom_call.1} parent=1 // pred_region
      %69 = dma.done [#allocation9], 256
    $region25: #{tpu_custom_call.1} parent=1 // pred_fallthru
      _
    // Predicated region
    $region26: #{tpu_custom_call.1} parent=1 // pred_check
      _
    $region27: #{tpu_custom_call.1} parent=1 // pred_check_branch
      %71 = sbr.rel (0) target = $region29
    $region28: #{tpu_custom_call.1} parent=1 // pred_region
      %72 = dma.done [#allocation9], 7424
    $region29: #{tpu_custom_call.1} parent=1 // pred_fallthru
      _
    // Predicated region
    $region30: #{tpu_custom_call.1} parent=1 // pred_check
      _
    $region31: #{tpu_custom_call.1} parent=1 // pred_check_branch
      %74 = sbr.rel (0) target = $region33
    $region32: #{tpu_custom_call.1} parent=1 // pred_region
      %75 = dma.done [#allocation12], 256
    $region33: #{tpu_custom_call.1} parent=1 // pred_fallthru
      _
    %v77 = vld [vmem:[#allocation10] sm:$0xff]
    %v78 = vld [vmem:[#allocation10 + $0x8] sm:$0xff]
    %v79 = vld [vmem:[#allocation10 + $0x10] sm:$0xf]
    %v80 = vld [vmem:[#allocation10 + $0x18] sm:$0xf]
    %v81 = vld [vmem:[#allocation10 + $0x20] sm:$0xf]
    %v82 = vld [vmem:[#allocation10 + $0x28] sm:$0xf]
    %v83 = vld [vmem:[#allocation10 + $0x30] sm:$0xf]
    %v84 = vld [vmem:[#allocation10 + $0x38] sm:$0xf]
    %v85 = vld [vmem:[#allocation10 + $0x40] sm:$0xf]
    %v86 = vld [vmem:[#allocation10 + $0x48] sm:$0xf]
    %v87 = vld [vmem:[#allocation10 + $0x50] sm:$0xf]
    %v88 = vld [vmem:[#allocation10 + $0x58] sm:$0xf]
    %v89 = vld [vmem:[#allocation10 + $0x60] sm:$0xf]
    %v90 = vld [vmem:[#allocation10 + $0x68] sm:$0xf]
    %v91 = vld [vmem:[#allocation10 + $0x70] sm:$0xf]
    %v92 = vld [vmem:[#allocation10 + $0x78] sm:$0xf]
    %v93 = vld [vmem:[#allocation10 + $0x80] sm:$0xf]
    %v94 = vld [vmem:[#allocation10 + $0x88] sm:$0xf]
    %v95 = vld [vmem:[#allocation10 + $0x90] sm:$0xf]
    %v96 = vld [vmem:[#allocation10 + $0x98] sm:$0xf]
    %v97 = vld [vmem:[#allocation10 + $0xa0] sm:$0xf]
    %v98 = vld [vmem:[#allocation10 + $0xa8] sm:$0xf]
    %v99 = vld [vmem:[#allocation10 + $0xb0] sm:$0xf]
    %v100 = vld [vmem:[#allocation10 + $0xb8] sm:$0xf]
    %v101 = vld [vmem:[#allocation10 + $0xc0] sm:$0xf]
    %v102 = vld [vmem:[#allocation10 + $0xc8] sm:$0xf]
    %v103 = vld [vmem:[#allocation10 + $0xd0] sm:$0xf]
    %v104 = vld [vmem:[#allocation10 + $0xd8] sm:$0xf]
    %v105 = vld [vmem:[#allocation10 + $0xe0] sm:$0xf]
    %v106 = vld [vmem:[#allocation10 + $0xe8] sm:$0xf]
    %v107 = vld [vmem:[#allocation10 + $0xf0] sm:$0xf]
    %v108 = vld [vmem:[#allocation10 + $0xf8] sm:$0xf]
    %v109 = vld [vmem:[#allocation10 + $0x100] sm:$0xf]
    %v110 = vld [vmem:[#allocation10 + $0x108] sm:$0xf]
    %v111 = vld [vmem:[#allocation10 + $0x110] sm:$0xf]
    %v112 = vld [vmem:[#allocation10 + $0x118] sm:$0xf]
    %v113 = vld [vmem:[#allocation10 + $0x120] sm:$0xf]
    %v114 = vld [vmem:[#allocation10 + $0x128] sm:$0xf]
    %v115 = vld [vmem:[#allocation10 + $0x130] sm:$0xf]
    %v116 = vld [vmem:[#allocation10 + $0x138] sm:$0xf]
    %v117 = vld [vmem:[#allocation10 + $0x140] sm:$0xf]
    %v118 = vld [vmem:[#allocation10 + $0x148] sm:$0xf]
    %v119 = vld [vmem:[#allocation10 + $0x150] sm:$0xf]
    %v120 = vld [vmem:[#allocation10 + $0x158] sm:$0xf]
    %v121 = vld [vmem:[#allocation10 + $0x160] sm:$0xf]
    %v122 = vld [vmem:[#allocation10 + $0x168] sm:$0xf]
    %v123 = vld [vmem:[#allocation10 + $0x170] sm:$0xf]
    %v124 = vld [vmem:[#allocation10 + $0x178] sm:$0xf]
    %v125 = vld [vmem:[#allocation10 + $0x180] sm:$0xf]
    %v126 = vld [vmem:[#allocation10 + $0x188] sm:$0xf]
    %v127 = vld [vmem:[#allocation10 + $0x190] sm:$0xf]
    %v128 = vld [vmem:[#allocation10 + $0x198] sm:$0xf]
    %v129 = vld [vmem:[#allocation10 + $0x1a0] sm:$0xf]
    %v130 = vld [vmem:[#allocation10 + $0x1a8] sm:$0xf]
    %v131 = vld [vmem:[#allocation10 + $0x1b0] sm:$0xf]
    %v132 = vld [vmem:[#allocation10 + $0x1b8] sm:$0xf]
    %v133 = vld [vmem:[#allocation10 + $0x1c0] sm:$0xf]
    %v134 = vld [vmem:[#allocation10 + $0x1c8] sm:$0xf]
    %v135 = vld [vmem:[#allocation11] ss:$8 sm:$0x3]
    %v136 = vld [vmem:[#allocation11 + $0x1] ss:$0 sm:$0xff]
    %v137 = vld [vmem:[#allocation11 + $0x2] ss:$0 sm:$0xff]
    %v138 = vld [vmem:[#allocation11 + $0x3] ss:$0 sm:$0xff]
    %v139 = vld [vmem:[#allocation11 + $0x4] ss:$0 sm:$0xff]
    %v140 = vld [vmem:[#allocation11 + $0x5] ss:$0 sm:$0xff]
    %v141 = vld [vmem:[#allocation8] sm:$0xff]
    %v142 = vld [vmem:[#allocation8 + $0x8] sm:$0xff]
    %v143 = vld [vmem:[#allocation5] sm:$0xf]
    %v144 = vld [vmem:[#allocation5 + $0x4] sm:$0xf]
    %v146 = vlaneseq
    %v147 = vshrl.u32 %v146, 7
    %v148 = vsub.s32 0, %v147
    %v149 = vrot.slane %v135, %v148
    %v150 = vlaneseq
    %v151 = vshrl.u32 %v150, 7
    %v152 = vsub.s32 1, %v151
    %v153 = vrot.slane %v135, %v152
    %v158 = vunpack.c.l.b16 %v143
    %v159 = vunpack.c.l.b16 %v144
    %v160 = vpack.c.b16 %v159, %v158
    %v163 = vunpack.c.l.b16 %v77
    %v164 = vunpack.c.h.b16 %v77
    %v165 = vunpack.c.l.b16 %v78
    %v166 = vunpack.c.h.b16 %v78
    %v167 = vpack.c.b16 %v165, %v163
    %v168 = vpack.c.b16 %v166, %v164
    %vm171 = vcmask 130048
    %v173 = vsel %vm171, %v160, 0
    %175 = vmatprep.subr.bf16.mxu0 0
    %176 = vmatpush1.bf16.msra.mxu0 0
    %177 = vmatprep.subr.bf16.mxu0 0
    %178 = vmatpush1.bf16.msra.mxu0 0
    %179 = vmatprep.subr.bf16.mxu0 0
    %180 = vmatpush1.bf16.msra.mxu0 0
    %181 = vmatprep.subr.bf16.mxu0 0
    %182 = vmatpush1.bf16.msra.mxu0 0
    %183 = vmatprep.subr.bf16.mxu0 0
    %184 = vmatpush1.bf16.msra.mxu0 0
    %185 = vmatprep.subr.bf16.mxu0 0
    %186 = vmatpush1.bf16.msra.mxu0 0
    %187 = vmatprep.subr.bf16.mxu0 0
    %188 = vmatpush1.bf16.msra.mxu0 0
    %189 = vmatprep.subr.bf16.mxu0 %v168
    %190 = vmatpush1.bf16.msra.mxu0 %v167
    %191 = vmatprep.subr.bf16.mxu0 0
    %192 = vmatpush2.bf16.msra.mxu0 0
    %193 = vmatprep.subr.bf16.mxu0 0
    %194 = vmatpush2.bf16.msra.mxu0 0
    %195 = vmatprep.subr.bf16.mxu0 0
    %196 = vmatpush2.bf16.msra.mxu0 0
    %197 = vmatprep.subr.bf16.mxu0 0
    %198 = vmatpush2.bf16.msra.mxu0 0
    %199 = vmatprep.subr.bf16.mxu0 0
    %200 = vmatpush2.bf16.msra.mxu0 0
    %201 = vmatprep.subr.bf16.mxu0 0
    %202 = vmatpush2.bf16.msra.mxu0 0
    %203 = vmatprep.subr.bf16.mxu0 0
    %204 = vmatpush2.bf16.msra.mxu0 0
    %205 = vmatprep.subr.bf16.mxu0 0
    %206 = vmatpush2.bf16.msra.mxu0 0
    %207 = vmatprep.mubr.bf16.mxu0 0
    %208 = vmatmul.mubr.bf16.gmra.mxu0 %v173
    %v209 = vpop.f32.mrf.mxu0
    %v210 = vadd.f32 %v149, %v209
    %v211 = vpop.f32.mrf.mxu0
    %v212 = vadd.f32 %v153, %v211
    %v213 = vpop.f32.mrf.mxu0
    %v214 = vadd.f32 %v149, %v213
    %v215 = vpop.f32.mrf.mxu0
    %v216 = vadd.f32 %v153, %v215
    %217 = vdwg.mxu0
    %v218 = vmax.f32 %v210, 0.0
    %v219 = vmax.f32 %v212, 0.0
    %v220 = vmax.f32 %v214, 0.0
    %v221 = vmax.f32 %v216, 0.0
    %v222 = vpack.c.bf16 %v220, %v218
    %v223 = vpack.c.bf16 %v221, %v219
    %v256 = vunpack.c.l.b16 %v79
    %v257 = vunpack.c.l.b16 %v80
    %v258 = vunpack.c.l.b16 %v81
    %v259 = vunpack.c.l.b16 %v82
    %v260 = vunpack.c.l.b16 %v83
    %v261 = vunpack.c.l.b16 %v84
    %v262 = vunpack.c.l.b16 %v85
    %v263 = vunpack.c.l.b16 %v86
    %v264 = vunpack.c.l.b16 %v87
    %v265 = vunpack.c.l.b16 %v88
    %v266 = vunpack.c.l.b16 %v89
    %v267 = vunpack.c.l.b16 %v90
    %v268 = vunpack.c.l.b16 %v91
    %v269 = vunpack.c.l.b16 %v92
    %v270 = vunpack.c.l.b16 %v93
    %v271 = vunpack.c.l.b16 %v94
    %v272 = vunpack.c.l.b16 %v95
    %v273 = vunpack.c.l.b16 %v96
    %v274 = vunpack.c.l.b16 %v97
    %v275 = vunpack.c.l.b16 %v98
    %v276 = vunpack.c.l.b16 %v99
    %v277 = vunpack.c.l.b16 %v100
    %v278 = vunpack.c.l.b16 %v101
    %v279 = vunpack.c.l.b16 %v102
    %v280 = vunpack.c.l.b16 %v103
    %v281 = vunpack.c.l.b16 %v104
    %v282 = vunpack.c.l.b16 %v105
    %v283 = vunpack.c.l.b16 %v106
    %v284 = vunpack.c.l.b16 %v107
    %v285 = vunpack.c.l.b16 %v108
    %v286 = vunpack.c.l.b16 %v109
    %v287 = vunpack.c.l.b16 %v110
    %v288 = vpack.c.b16 %v257, %v256
    %v289 = vpack.c.b16 %v259, %v258
    %v290 = vpack.c.b16 %v261, %v260
    %v291 = vpack.c.b16 %v263, %v262
    %v292 = vpack.c.b16 %v265, %v264
    %v293 = vpack.c.b16 %v267, %v266
    %v294 = vpack.c.b16 %v269, %v268
    %v295 = vpack.c.b16 %v271, %v270
    %v296 = vpack.c.b16 %v273, %v272
    %v297 = vpack.c.b16 %v275, %v274
    %v298 = vpack.c.b16 %v277, %v276
    %v299 = vpack.c.b16 %v279, %v278
    %v300 = vpack.c.b16 %v281, %v280
    %v301 = vpack.c.b16 %v283, %v282
    %v302 = vpack.c.b16 %v285, %v284
    %v303 = vpack.c.b16 %v287, %v286
    %320 = vmatprep.subr.bf16.mxu0 0
    %321 = vmatpush1.bf16.msra.mxu0 %v295
    %322 = vmatprep.subr.bf16.mxu0 0
    %323 = vmatpush1.bf16.msra.mxu0 %v294
    %324 = vmatprep.subr.bf16.mxu0 0
    %325 = vmatpush1.bf16.msra.mxu0 %v293
    %326 = vmatprep.subr.bf16.mxu0 0
    %327 = vmatpush1.bf16.msra.mxu0 %v292
    %328 = vmatprep.subr.bf16.mxu0 0
    %329 = vmatpush1.bf16.msra.mxu0 %v291
    %330 = vmatprep.subr.bf16.mxu0 0
    %331 = vmatpush1.bf16.msra.mxu0 %v290
    %332 = vmatprep.subr.bf16.mxu0 0
    %333 = vmatpush1.bf16.msra.mxu0 %v289
    %334 = vmatprep.subr.bf16.mxu0 0
    %335 = vmatpush1.bf16.msra.mxu0 %v288
    %336 = vmatprep.subr.bf16.mxu0 0
    %337 = vmatpush2.bf16.msra.mxu0 %v303
    %338 = vmatprep.subr.bf16.mxu0 0
    %339 = vmatpush2.bf16.msra.mxu0 %v302
    %340 = vmatprep.subr.bf16.mxu0 0
    %341 = vmatpush2.bf16.msra.mxu0 %v301
    %342 = vmatprep.subr.bf16.mxu0 0
    %343 = vmatpush2.bf16.msra.mxu0 %v300
    %344 = vmatprep.subr.bf16.mxu0 0
    %345 = vmatpush2.bf16.msra.mxu0 %v299
    %346 = vmatprep.subr.bf16.mxu0 0
    %347 = vmatpush2.bf16.msra.mxu0 %v298
    %348 = vmatprep.subr.bf16.mxu0 0
    %349 = vmatpush2.bf16.msra.mxu0 %v297
    %350 = vmatprep.subr.bf16.mxu0 0
    %351 = vmatpush2.bf16.msra.mxu0 %v296
    %352 = vmatprep.mubr.bf16.mxu0 %v223
    %353 = vmatmul.mubr.bf16.gmra.mxu0 %v222
    %v354 = vpop.f32.mrf.mxu0
    %v355 = vadd.f32 %v136, %v354
    %v356 = vpop.f32.mrf.mxu0
    %v357 = vpop.f32.mrf.mxu0
    %v358 = vadd.f32 %v136, %v357
    %v359 = vpop.f32.mrf.mxu0
    %360 = vdwg.mxu0
    %v361 = vmax.f32 %v355, 0.0
    %v362 = vmax.f32 %v358, 0.0
    %v363 = vpack.c.bf16 %v362, %v361
    %v380 = vunpack.c.l.b16 %v111
    %v381 = vunpack.c.l.b16 %v112
    %v382 = vunpack.c.l.b16 %v113
    %v383 = vunpack.c.l.b16 %v114
    %v384 = vunpack.c.l.b16 %v115
    %v385 = vunpack.c.l.b16 %v116
    %v386 = vunpack.c.l.b16 %v117
    %v387 = vunpack.c.l.b16 %v118
    %v388 = vunpack.c.l.b16 %v119
    %v389 = vunpack.c.l.b16 %v120
    %v390 = vunpack.c.l.b16 %v121
    %v391 = vunpack.c.l.b16 %v122
    %v392 = vunpack.c.l.b16 %v123
    %v393 = vunpack.c.l.b16 %v124
    %v394 = vunpack.c.l.b16 %v125
    %v395 = vunpack.c.l.b16 %v126
    %v396 = vpack.c.b16 %v381, %v380
    %v397 = vpack.c.b16 %v383, %v382
    %v398 = vpack.c.b16 %v385, %v384
    %v399 = vpack.c.b16 %v387, %v386
    %v400 = vpack.c.b16 %v389, %v388
    %v401 = vpack.c.b16 %v391, %v390
    %v402 = vpack.c.b16 %v393, %v392
    %v403 = vpack.c.b16 %v395, %v394
    %412 = vmatprep.subr.bf16.mxu0 0
    %413 = vmatpush1.bf16.msra.mxu0 %v403
    %414 = vmatprep.subr.bf16.mxu0 0
    %415 = vmatpush1.bf16.msra.mxu0 %v402
    %416 = vmatprep.subr.bf16.mxu0 0
    %417 = vmatpush1.bf16.msra.mxu0 %v401
    %418 = vmatprep.subr.bf16.mxu0 0
    %419 = vmatpush1.bf16.msra.mxu0 %v400
    %420 = vmatprep.subr.bf16.mxu0 0
    %421 = vmatpush1.bf16.msra.mxu0 %v399
    %422 = vmatprep.subr.bf16.mxu0 0
    %423 = vmatpush1.bf16.msra.mxu0 %v398
    %424 = vmatprep.subr.bf16.mxu0 0
    %425 = vmatpush1.bf16.msra.mxu0 %v397
    %426 = vmatprep.subr.bf16.mxu0 0
    %427 = vmatpush1.bf16.msra.mxu0 %v396
    %428 = vmatprep.subr.bf16.mxu0 0
    %429 = vmatpush2.bf16.msra.mxu0 0
    %430 = vmatprep.subr.bf16.mxu0 0
    %431 = vmatpush2.bf16.msra.mxu0 0
    %432 = vmatprep.subr.bf16.mxu0 0
    %433 = vmatpush2.bf16.msra.mxu0 0
    %434 = vmatprep.subr.bf16.mxu0 0
    %435 = vmatpush2.bf16.msra.mxu0 0
    %436 = vmatprep.subr.bf16.mxu0 0
    %437 = vmatpush2.bf16.msra.mxu0 0
    %438 = vmatprep.subr.bf16.mxu0 0
    %439 = vmatpush2.bf16.msra.mxu0 0
    %440 = vmatprep.subr.bf16.mxu0 0
    %441 = vmatpush2.bf16.msra.mxu0 0
    %442 = vmatprep.subr.bf16.mxu0 0
    %443 = vmatpush2.bf16.msra.mxu0 0
    %444 = vmatprep.mubr.bf16.mxu0 0
    %445 = vmatmul.mubr.bf16.gmra.mxu0 %v363
    %v446 = vpop.f32.mrf.mxu0
    %v447 = vadd.f32 0.0, %v446
    %v448 = vpop.f32.mrf.mxu0
    %v449 = vpop.f32.mrf.mxu0
    %v450 = vadd.f32 0.0, %v449
    %v451 = vpop.f32.mrf.mxu0
    %452 = vdwg.mxu0
    %v454 = vsel %vm171, %v141, 0
    %v457 = vsel %vm171, %v142, 0
    %459 = vmatprep.subr.mxu0 0.0
    %460 = vmatpush1.msra.mxu0 0.0
    %461 = vmatprep.subr.mxu0 0.0
    %462 = vmatpush1.msra.mxu0 0.0
    %463 = vmatprep.subr.mxu0 0.0
    %464 = vmatpush1.msra.mxu0 0.0
    %465 = vmatprep.subr.mxu0 0.0
    %466 = vmatpush1.msra.mxu0 0.0
    %467 = vmatprep.subr.mxu0 0.0
    %468 = vmatpush1.msra.mxu0 0.0
    %469 = vmatprep.subr.mxu0 0.0
    %470 = vmatpush1.msra.mxu0 0.0
    %471 = vmatprep.subr.mxu0 0.0
    %472 = vmatpush1.msra.mxu0 0.0
    %473 = vmatprep.subr.mxu0 0.0
    %474 = vmatpush1.msra.mxu0 0.0
    %475 = vmatprep.subr.mxu0 0.0
    %476 = vmatpush1.msra.mxu0 0.0
    %477 = vmatprep.subr.mxu0 0.0
    %478 = vmatpush1.msra.mxu0 0.0
    %479 = vmatprep.subr.mxu0 0.0
    %480 = vmatpush1.msra.mxu0 0.0
    %481 = vmatprep.subr.mxu0 0.0
    %482 = vmatpush1.msra.mxu0 0.0
    %483 = vmatprep.subr.mxu0 0.0
    %484 = vmatpush1.msra.mxu0 0.0
    %485 = vmatprep.subr.mxu0 0.0
    %486 = vmatpush1.msra.mxu0 0.0
    %487 = vmatprep.subr.mxu0 0.0
    %488 = vmatpush1.msra.mxu0 %v450
    %489 = vmatprep.subr.mxu0 0.0
    %490 = vmatpush1.msra.mxu0 %v447
    %491 = vmatprep.subr.mxu0 0.0
    %492 = vmatpush2.msra.mxu0 0.0
    %493 = vmatprep.subr.mxu0 0.0
    %494 = vmatpush2.msra.mxu0 0.0
    %495 = vmatprep.subr.mxu0 0.0
    %496 = vmatpush2.msra.mxu0 0.0
    %497 = vmatprep.subr.mxu0 0.0
    %498 = vmatpush2.msra.mxu0 0.0
    %499 = vmatprep.subr.mxu0 0.0
    %500 = vmatpush2.msra.mxu0 0.0
    %501 = vmatprep.subr.mxu0 0.0
    %502 = vmatpush2.msra.mxu0 0.0
    %503 = vmatprep.subr.mxu0 0.0
    %504 = vmatpush2.msra.mxu0 0.0
    %505 = vmatprep.subr.mxu0 0.0
    %506 = vmatpush2.msra.mxu0 0.0
    %507 = vmatprep.subr.mxu0 0.0
    %508 = vmatpush2.msra.mxu0 0.0
    %509 = vmatprep.subr.mxu0 0.0
    %510 = vmatpush2.msra.mxu0 0.0
    %511 = vmatprep.subr.mxu0 0.0
    %512 = vmatpush2.msra.mxu0 0.0
    %513 = vmatprep.subr.mxu0 0.0
    %514 = vmatpush2.msra.mxu0 0.0
    %515 = vmatprep.subr.mxu0 0.0
    %516 = vmatpush2.msra.mxu0 0.0
    %517 = vmatprep.subr.mxu0 0.0
    %518 = vmatpush2.msra.mxu0 0.0
    %519 = vmatprep.subr.mxu0 0.0
    %520 = vmatpush2.msra.mxu0 0.0
    %521 = vmatprep.subr.mxu0 0.0
    %522 = vmatpush2.msra.mxu0 0.0
    %523 = vmatprep.mubr.f32.mxu0 0.0
    %524 = vmatmul.mubr.f32.gmra.mxu0 %v454
    %v525 = vpop.f32.mrf.mxu0
    %v526 = vadd.f32 %v137, %v525
    %v527 = vpop.f32.mrf.mxu0
    %528 = vmatprep.mubr.f32.mxu0 0.0
    %529 = vmatmul.mubr.f32.gmra.mxu0 %v457
    %v530 = vpop.f32.mrf.mxu0
    %v531 = vadd.f32 %v137, %v530
    %v532 = vpop.f32.mrf.mxu0
    %533 = vdwg.mxu0
    %v534 = vmax.f32 %v526, 0.0
    %v535 = vmax.f32 %v531, 0.0
    %v536 = vpack.c.bf16 %v535, %v534
    %v545 = vunpack.c.l.b16 %v127
    %v546 = vunpack.c.l.b16 %v128
    %v547 = vunpack.c.l.b16 %v129
    %v548 = vunpack.c.l.b16 %v130
    %v549 = vunpack.c.l.b16 %v131
    %v550 = vunpack.c.l.b16 %v132
    %v551 = vunpack.c.l.b16 %v133
    %v552 = vunpack.c.l.b16 %v134
    %v553 = vpack.c.b16 %v546, %v545
    %v554 = vpack.c.b16 %v548, %v547
    %v555 = vpack.c.b16 %v550, %v549
    %v556 = vpack.c.b16 %v552, %v551
    %vm561 = vcmask 523264
    %v563 = vsel %vm561, %v536, 0
    %565 = vmatprep.subr.bf16.mxu0 0
    %566 = vmatpush1.bf16.msra.mxu0 0
    %567 = vmatprep.subr.bf16.mxu0 0
    %568 = vmatpush1.bf16.msra.mxu0 0
    %569 = vmatprep.subr.bf16.mxu0 0
    %570 = vmatpush1.bf16.msra.mxu0 0
    %571 = vmatprep.subr.bf16.mxu0 0
    %572 = vmatpush1.bf16.msra.mxu0 0
    %573 = vmatprep.subr.bf16.mxu0 0
    %574 = vmatpush1.bf16.msra.mxu0 %v556
    %575 = vmatprep.subr.bf16.mxu0 0
    %576 = vmatpush1.bf16.msra.mxu0 %v555
    %577 = vmatprep.subr.bf16.mxu0 0
    %578 = vmatpush1.bf16.msra.mxu0 %v554
    %579 = vmatprep.subr.bf16.mxu0 0
    %580 = vmatpush1.bf16.msra.mxu0 %v553
    %581 = vmatprep.subr.bf16.mxu0 0
    %582 = vmatpush2.bf16.msra.mxu0 0
    %583 = vmatprep.subr.bf16.mxu0 0
    %584 = vmatpush2.bf16.msra.mxu0 0
    %585 = vmatprep.subr.bf16.mxu0 0
    %586 = vmatpush2.bf16.msra.mxu0 0
    %587 = vmatprep.subr.bf16.mxu0 0
    %588 = vmatpush2.bf16.msra.mxu0 0
    %589 = vmatprep.subr.bf16.mxu0 0
    %590 = vmatpush2.bf16.msra.mxu0 0
    %591 = vmatprep.subr.bf16.mxu0 0
    %592 = vmatpush2.bf16.msra.mxu0 0
    %593 = vmatprep.subr.bf16.mxu0 0
    %594 = vmatpush2.bf16.msra.mxu0 0
    %595 = vmatprep.subr.bf16.mxu0 0
    %596 = vmatpush2.bf16.msra.mxu0 0
    %597 = vmatprep.mubr.bf16.mxu0 0
    %598 = vmatmul.mubr.bf16.gmra.mxu0 %v563
    %v599 = vpop.f32.mrf.mxu0
    %v600 = vadd.f32 0.0, %v599
    %v601 = vpop.f32.mrf.mxu0
    %v602 = vpop.f32.mrf.mxu0
    %v603 = vadd.f32 0.0, %v602
    %v604 = vpop.f32.mrf.mxu0
    %605 = vdwg.mxu0
    %606 = vmatprep.subr.mxu0 0.0
    %607 = vmatpush1.msra.mxu0 0.0
    %608 = vmatprep.subr.mxu0 0.0
    %609 = vmatpush1.msra.mxu0 0.0
    %610 = vmatprep.subr.mxu0 0.0
    %611 = vmatpush1.msra.mxu0 0.0
    %612 = vmatprep.subr.mxu0 0.0
    %613 = vmatpush1.msra.mxu0 0.0
    %614 = vmatprep.subr.mxu0 0.0
    %615 = vmatpush1.msra.mxu0 0.0
    %616 = vmatprep.subr.mxu0 0.0
    %617 = vmatpush1.msra.mxu0 0.0
    %618 = vmatprep.subr.mxu0 0.0
    %619 = vmatpush1.msra.mxu0 0.0
    %620 = vmatprep.subr.mxu0 0.0
    %621 = vmatpush1.msra.mxu0 0.0
    %622 = vmatprep.subr.mxu0 0.0
    %623 = vmatpush1.msra.mxu0 0.0
    %624 = vmatprep.subr.mxu0 0.0
    %625 = vmatpush1.msra.mxu0 0.0
    %626 = vmatprep.subr.mxu0 0.0
    %627 = vmatpush1.msra.mxu0 0.0
    %628 = vmatprep.subr.mxu0 0.0
    %629 = vmatpush1.msra.mxu0 0.0
    %630 = vmatprep.subr.mxu0 0.0
    %631 = vmatpush1.msra.mxu0 0.0
    %632 = vmatprep.subr.mxu0 0.0
    %633 = vmatpush1.msra.mxu0 0.0
    %634 = vmatprep.subr.mxu0 0.0
    %635 = vmatpush1.msra.mxu0 %v603
    %636 = vmatprep.subr.mxu0 0.0
    %637 = vmatpush1.msra.mxu0 %v600
    %638 = vmatprep.subr.mxu0 0.0
    %639 = vmatpush2.msra.mxu0 0.0
    %640 = vmatprep.subr.mxu0 0.0
    %641 = vmatpush2.msra.mxu0 0.0
    %642 = vmatprep.subr.mxu0 0.0
    %643 = vmatpush2.msra.mxu0 0.0
    %644 = vmatprep.subr.mxu0 0.0
    %645 = vmatpush2.msra.mxu0 0.0
    %646 = vmatprep.subr.mxu0 0.0
    %647 = vmatpush2.msra.mxu0 0.0
    %648 = vmatprep.subr.mxu0 0.0
    %649 = vmatpush2.msra.mxu0 0.0
    %650 = vmatprep.subr.mxu0 0.0
    %651 = vmatpush2.msra.mxu0 0.0
    %652 = vmatprep.subr.mxu0 0.0
    %653 = vmatpush2.msra.mxu0 0.0
    %654 = vmatprep.subr.mxu0 0.0
    %655 = vmatpush2.msra.mxu0 0.0
    %656 = vmatprep.subr.mxu0 0.0
    %657 = vmatpush2.msra.mxu0 0.0
    %658 = vmatprep.subr.mxu0 0.0
    %659 = vmatpush2.msra.mxu0 0.0
    %660 = vmatprep.subr.mxu0 0.0
    %661 = vmatpush2.msra.mxu0 0.0
    %662 = vmatprep.subr.mxu0 0.0
    %663 = vmatpush2.msra.mxu0 0.0
    %664 = vmatprep.subr.mxu0 0.0
    %665 = vmatpush2.msra.mxu0 0.0
    %666 = vmatprep.subr.mxu0 0.0
    %667 = vmatpush2.msra.mxu0 0.0
    %668 = vmatprep.subr.mxu0 0.0
    %669 = vmatpush2.msra.mxu0 0.0
    %670 = vmatprep.mubr.f32.mxu0 0.0
    %671 = vmatmul.mubr.f32.gmra.mxu0 %v454
    %v672 = vpop.f32.mrf.mxu0
    %v673 = vadd.f32 %v138, %v672
    %v674 = vpop.f32.mrf.mxu0
    %675 = vmatprep.mubr.f32.mxu0 0.0
    %676 = vmatmul.mubr.f32.gmra.mxu0 %v457
    %v677 = vpop.f32.mrf.mxu0
    %v678 = vadd.f32 %v138, %v677
    %v679 = vpop.f32.mrf.mxu0
    %680 = vdwg.mxu0
    %v681 = vmax.f32 %v673, 0.0
    %v682 = vmax.f32 %v678, 0.0
    %vm683 = vcmask 261120
    %684 = vst.msk [vmem:[#allocation2] sm:$0xff] %vm683, %v681
    %685 = vst.msk [vmem:[#allocation2 + $0x8] sm:$0xff] %vm683, %v682
    %s686 = sld [smem:[#allocation4]]
    %s687 = scalar_lea.vmem [#allocation2], %s686
    %v688 = vld [vmem:[%s687] sm:$0x1]
    %s689 = sld [smem:[#allocation4 + $0x80]]
    %s690 = scalar_lea.vmem [#allocation2], %s689
    %v691 = vld [vmem:[%s690] sm:$0x1]
    %s692 = sld [smem:[#allocation4 + $0x1]]
    %s693 = scalar_lea.vmem [#allocation2], %s692
    %v694 = vld [vmem:[%s693] sm:$0x1]
    %s695 = sld [smem:[#allocation4 + $0x81]]
    %s696 = scalar_lea.vmem [#allocation2], %s695
    %v697 = vld [vmem:[%s696] sm:$0x1]
    %s698 = sld [smem:[#allocation4 + $0x2]]
    %s699 = scalar_lea.vmem [#allocation2], %s698
    %v700 = vld [vmem:[%s699] sm:$0x1]
    %s701 = sld [smem:[#allocation4 + $0x82]]
    %s702 = scalar_lea.vmem [#allocation2], %s701
    %v703 = vld [vmem:[%s702] sm:$0x1]
    %s704 = sld [smem:[#allocation4 + $0x3]]
    %s705 = scalar_lea.vmem [#allocation2], %s704
    %v706 = vld [vmem:[%s705] sm:$0x1]
    %s707 = sld [smem:[#allocation4 + $0x83]]
    %s708 = scalar_lea.vmem [#allocation2], %s707
    %v709 = vld [vmem:[%s708] sm:$0x1]
    %s710 = sld [smem:[#allocation4 + $0x4]]
    %s711 = scalar_lea.vmem [#allocation2], %s710
    %v712 = vld [vmem:[%s711] sm:$0x1]
    %s713 = sld [smem:[#allocation4 + $0x84]]
    %s714 = scalar_lea.vmem [#allocation2], %s713
    %v715 = vld [vmem:[%s714] sm:$0x1]
    %s716 = sld [smem:[#allocation4 + $0x5]]
    %s717 = scalar_lea.vmem [#allocation2], %s716
    %v718 = vld [vmem:[%s717] sm:$0x1]
    %s719 = sld [smem:[#allocation4 + $0x85]]
    %s720 = scalar_lea.vmem [#allocation2], %s719
    %v721 = vld [vmem:[%s720] sm:$0x1]
    %s722 = sld [smem:[#allocation4 + $0x6]]
    %s723 = scalar_lea.vmem [#allocation2], %s722
    %v724 = vld [vmem:[%s723] sm:$0x1]
    %s725 = sld [smem:[#allocation4 + $0x86]]
    %s726 = scalar_lea.vmem [#allocation2], %s725
    %v727 = vld [vmem:[%s726] sm:$0x1]
    %s728 = sld [smem:[#allocation4 + $0x7]]
    %s729 = scalar_lea.vmem [#allocation2], %s728
    %v730 = vld [vmem:[%s729] sm:$0x1]
    %s731 = sld [smem:[#allocation4 + $0x87]]
    %s732 = scalar_lea.vmem [#allocation2], %s731
    %v733 = vld [vmem:[%s732] sm:$0x1]
    %v735 = vrot.slane %v694, 7
    %v738 = vrot.slane %v700, 6
    %v741 = vrot.slane %v706, 5
    %v744 = vrot.slane %v712, 4
    %v747 = vrot.slane %v718, 3
    %v750 = vrot.slane %v724, 2
    %v753 = vrot.slane %v730, 1
    %vm755 = vcmask 1040384
    %v756 = vsel %vm755, %v688, %v735
    %vm757 = vcmask 1041408
    %v758 = vsel %vm757, %v756, %v738
    %vm759 = vcmask 1042432
    %v760 = vsel %vm759, %v758, %v741
    %vm761 = vcmask 1043456
    %v762 = vsel %vm761, %v760, %v744
    %vm763 = vcmask 1044480
    %v764 = vsel %vm763, %v762, %v747
    %vm765 = vcmask 1045504
    %v766 = vsel %vm765, %v764, %v750
    %vm767 = vcmask 1046528
    %v768 = vsel %vm767, %v766, %v753
    %v770 = vrot.slane %v697, 7
    %v773 = vrot.slane %v703, 6
    %v776 = vrot.slane %v709, 5
    %v779 = vrot.slane %v715, 4
    %v782 = vrot.slane %v721, 3
    %v785 = vrot.slane %v727, 2
    %v788 = vrot.slane %v733, 1
    %v790 = vsel %vm755, %v691, %v770
    %v791 = vsel %vm757, %v790, %v773
    %v792 = vsel %vm759, %v791, %v776
    %v793 = vsel %vm761, %v792, %v779
    %v794 = vsel %vm763, %v793, %v782
    %v795 = vsel %vm765, %v794, %v785
    %v796 = vsel %vm767, %v795, %v788
    %v797 = vmul.f32 %v768, %v796
    %v798 = vmul.f32 %v797, %v139
    %v799 = vsel %vm683, %v798, 0.0
    %800 = vadd.xlane.f32.xlu0 %v799
    %v801 = vpop.xlane.xlu0 %800
    %v802 = vadd.f32 %v801, %v140
    %804 = vset.pattern.permute.xlu0 0
    %805 = vperm.xlu0 %804, %v802
    %v806 = vpop.permute.xlu0 %805
    %809 = vrot.lane.b32.xlu0 %v681, 64
    %v810 = vpop.permute.xlu0 %809
    %811 = vrot.lane.b32.xlu0 %v682, 64
    %v812 = vpop.permute.xlu0 %811
    %816 = vrot.lane.b32.xlu0 %v806, 96
    %v817 = vpop.permute.xlu0 %816
    %818 = vrot.lane.b32.xlu0 0.0, 96
    %v819 = vpop.permute.xlu0 %818
    %v822 = vsel %vm561, %v534, %v810
    %v823 = vsel %vm561, %v535, %v812
    %vm824 = vcmask 785408
    %v825 = vsel %vm824, %v822, %v817
    %v826 = vsel %vm824, %v823, %v819
    %827 = vst [vmem:[#allocation13] sm:$0xff] %v825
    %828 = vst [vmem:[#allocation13 + $0x8] sm:$0xff] %v826
    // Predicated region
    $region34: #{tpu_custom_call.1} parent=1 // pred_check
      _
    $region35: #{tpu_custom_call.1} parent=1 // pred_check_branch
      %830 = sbr.rel (0) target = $region37
    $region36: #{tpu_custom_call.1} parent=1 // pred_region
      %s832 = ssub.s32 256, 256
      %833 = vsyncadd [#allocation7], %s832
      %s834 = sshll.u32 [#allocation13], 4
      %s835 = int_to_ptr.vmem [resolvable:$true] %s834
      %840 = dma.vmem_to_hbm [thread:$0]  %s835, 256, %s5, [#allocation7], 128, 128, 8
    $region37: #{tpu_custom_call.1} parent=1 // pred_fallthru
      _
    // Predicated region
    $region38: #{tpu_custom_call.1} parent=1 // pred_check
      _
    $region39: #{tpu_custom_call.1} parent=1 // pred_check_branch
      %842 = sbr.rel (0) target = $region41
    $region40: #{tpu_custom_call.1} parent=1 // pred_region
      %843 = dma.done [#allocation7], 256
    $region41: #{tpu_custom_call.1} parent=1 // pred_fallthru
      _
    %844 = vsyncpa [#allocation6], 1
    %845 = vsyncpa [#allocation9], 1
    %846 = vsyncpa [#allocation12], 1
    %847 = vsyncpa [#allocation7], 1

</llo_original>
